<compile_context>
chip_gen: v7x
topology: tpu7x:2x2x1
jax: 0.10.0
libtpu: 0.0.40
codegen_flags: <defaults>
</compile_context>

<pallas_src>
import functools

import jax
import jax.numpy as jnp
from jax.experimental import pallas as pl
from jax.experimental.pallas import tpu as pltpu

HIDDEN_LAYERS = [64, 64, 64, 16]   # matches the nn.Module
W_COLS = 64                        # max fan_out -> lane width of the weight blob
B_ROW_BLOCK = 8                    # f32 sublane-aligned row block per bias


def _layer_dims(input_dim, class_num):
    return tuple([input_dim * 100] + HIDDEN_LAYERS + [class_num])


def _w_offsets(dims):
    """Row offset of each (fan_in, W_COLS) weight slab inside w_blob."""
    offs, off = [], 0
    for fan_in in dims[:-1]:
        offs.append(off)
        off += (fan_in + 15) // 16 * 16     # bf16 sublane-tile aligned
    return offs, off


def _make_kernel(dims):
    n_layers = len(dims) - 1
    w_offs, _ = _w_offsets(dims)

    def kernel(x_ref, wb_ref, bb_ref, lab_ref, result_ref, loss_ref, correct_ref):
        def load_wb(li):
            fan_in, fan_out = dims[li], dims[li + 1]
            w = wb_ref[pl.ds(w_offs[li], fan_in), pl.ds(0, fan_out)]     # bf16
            b = bb_ref[pl.ds(B_ROW_BLOCK * li, 1), pl.ds(0, fan_out)]    # f32 (1, fan_out)
            return w, b

        h = x_ref[...]                                       # (B, in) bf16
        for li in range(n_layers - 1):                       # hidden layers + ReLU
            w, b = load_wb(li)
            y = jnp.dot(h, w, preferred_element_type=jnp.float32) + b
            h = jnp.maximum(y, 0.0).astype(jnp.bfloat16)     # bf16 only at MXU input
        w, b = load_wb(n_layers - 1)                         # output layer, no ReLU
        logits = jnp.dot(h, w, preferred_element_type=jnp.float32) + b   # (B, C) f32

        bsz, num_c = logits.shape

        # result = LogSoftmax(logits); m1 is reused below for the argmax.
        m1 = jnp.max(logits, axis=-1, keepdims=True)                     # (B, 1)
        lse = jnp.log(jnp.sum(jnp.exp(logits - m1), axis=-1, keepdims=True)) + m1
        result = logits - lse
        result_ref[...] = result

        # loss = CrossEntropyLoss(result, labels).  PyTorch re-applies
        # log_softmax, an identity on `result`, so the NLL reads straight off
        # `result` via a vectorized one-hot select over the whole batch.
        lab = lab_ref[...]                                               # (B, 1) i32
        iota_c = jax.lax.broadcasted_iota(jnp.int32, (bsz, num_c), 1)    # (B, C)
        onehot = iota_c == lab
        nll_sum = -jnp.sum(jnp.where(onehot, result, 0.0))
        loss_ref[0] = nll_sum * jnp.float32(1.0 / bsz)                   # mean reduction

        # correct = sum(argmax(logits, -1) == labels), first-max tie-break,
        # reusing the row max m1 (no second XLU max-reduce).
        row_is_max = logits == m1                                        # (B, C)
        amax = jnp.min(jnp.where(row_is_max, iota_c.astype(jnp.float32),
                                 jnp.float32(num_c)), axis=-1, keepdims=True)
        hits = (amax == lab.astype(jnp.float32)).astype(jnp.int32)       # (B, 1)
        correct_ref[0] = jnp.sum(hits)

    return kernel


@functools.partial(jax.jit, static_argnames=("dims",))
def example_dnn_forward(features, labels, w_blob, b_blob, dims):
    """Mirrors example_DNN.forward: returns (loss, result, correct, valid)."""
    bsz = features.shape[0]
    class_num = dims[-1]
    n_layers = len(dims) - 1

    # Contiguous row-major reshape -> XLA bitcast; cast to bf16 once here so
    # the widest activation is DMA'd at half width and is MXU-native.
    x = features.reshape(bsz, -1).astype(jnp.bfloat16)
    assert x.shape[1] == dims[0], (x.shape, dims)
    labels_col = labels.reshape(bsz, 1).astype(jnp.int32)

    _, w_rows = _w_offsets(dims)
    assert w_blob.shape == (w_rows, W_COLS), w_blob.shape
    assert b_blob.shape == (B_ROW_BLOCK * n_layers, W_COLS), b_blob.shape

    vmem = pl.BlockSpec(memory_space=pltpu.MemorySpace.VMEM)
    smem = pl.BlockSpec(memory_space=pltpu.MemorySpace.SMEM)

    flops = 2 * bsz * sum(dims[i] * dims[i + 1] for i in range(n_layers))
    bytes_accessed = (x.size * 2 + w_blob.size * 2 + b_blob.size * 4
                      + labels_col.size * 4 + bsz * class_num * 4 + 8)
    cost = pl.CostEstimate(flops=flops,
                           transcendentals=bsz * (class_num + 1),
                           bytes_accessed=bytes_accessed)

    result, loss, correct = pl.pallas_call(
        _make_kernel(dims),
        out_shape=(
            jax.ShapeDtypeStruct((bsz, class_num), jnp.float32),  # result (log-softmax)
            jax.ShapeDtypeStruct((1,), jnp.float32),              # loss (SMEM scalar)
            jax.ShapeDtypeStruct((1,), jnp.int32),                # correct (SMEM scalar)
        ),
        in_specs=[vmem, vmem, vmem, vmem],
        out_specs=(vmem, smem, smem),
        cost_estimate=cost,
    )(x, w_blob, b_blob, labels_col)

    valid = jnp.array([bsz], dtype=jnp.int32)   # torch.LongTensor([len(labels)])
    return loss[0], result, correct[0], valid


def init_packed_params(key, input_dim, class_num):
    """Deterministic synthetic parameters packed for the kernel.

    Returns (w_blob bf16 (rows, 64), b_blob f32 (8*n_layers, 64), dims).
    Weights are stored (in, out); columns beyond each layer's fan_out and the
    inter-layer row padding are zero.
    """
    dims = _layer_dims(input_dim, class_num)
    assert max(dims[1:]) <= W_COLS, "fan_out must fit the 64-lane weight blob"
    w_offs, w_rows = _w_offsets(dims)
    n_layers = len(dims) - 1

    w_blob = jnp.zeros((w_rows, W_COLS), jnp.float32)
    b_blob = jnp.zeros((B_ROW_BLOCK * n_layers, W_COLS), jnp.float32)
    for li in range(n_layers):
        fan_in, fan_out = dims[li], dims[li + 1]
        key, kw, kb = jax.random.split(key, 3)
        bound = 1.0 / float(fan_in) ** 0.5
        w = jax.random.uniform(kw, (fan_in, fan_out), jnp.float32,
                               minval=-bound, maxval=bound)
        b = jax.random.uniform(kb, (fan_out,), jnp.float32,
                               minval=-bound, maxval=bound)
        w_blob = w_blob.at[w_offs[li]:w_offs[li] + fan_in, :fan_out].set(w)
        b_blob = b_blob.at[B_ROW_BLOCK * li, :fan_out].set(b)
    return w_blob.astype(jnp.bfloat16), b_blob, dims


def reference_forward(features, labels, w_blob, b_blob, dims):
    """Pure-JAX reference on the same packed/bf16 parameters."""
    bsz = features.shape[0]
    n_layers = len(dims) - 1
    w_offs, _ = _w_offsets(dims)
    h = features.reshape(bsz, -1).astype(jnp.bfloat16)
    logits = None
    for li in range(n_layers):
        fan_in, fan_out = dims[li], dims[li + 1]
        w = w_blob[w_offs[li]:w_offs[li] + fan_in, :fan_out]
        b = b_blob[B_ROW_BLOCK * li, :fan_out]
        y = jnp.dot(h, w, preferred_element_type=jnp.float32) + b
        if li < n_layers - 1:
            h = jnp.maximum(y, 0.0).astype(jnp.bfloat16)
        else:
            logits = y
    result = jax.nn.log_softmax(logits, axis=-1)
    loss = -jnp.mean(result[jnp.arange(bsz), labels])
    correct = jnp.sum((jnp.argmax(logits, axis=-1) == labels).astype(jnp.int32))
    return loss, result, correct


if __name__ == "__main__":
    INPUT_DIM = 4      # nn.Linear(input_dim * 100, 64) -> flattened dim = 400
    CLASS_NUM = 8
    B, S = 2, 100      # features.view(B, S*D) requires S*D == input_dim*100

    key = jax.random.PRNGKey(0)
    k_feat, k_lab, k_par = jax.random.split(key, 3)

    features = jax.random.normal(k_feat, (B, S, INPUT_DIM), jnp.float32)
    labels = jax.random.randint(k_lab, (B,), 0, CLASS_NUM, jnp.int32)
    w_blob, b_blob, dims = init_packed_params(k_par, INPUT_DIM, CLASS_NUM)

    loss, result, correct, valid = example_dnn_forward(
        features, labels, w_blob, b_blob, dims)
    jax.block_until_ready((loss, result, correct, valid))

    assert result.shape == (B, CLASS_NUM)
    assert loss.shape == () and correct.shape == ()

    # Consistency check against a pure-JAX reference on identical parameters.
    ref_loss, ref_result, ref_correct = reference_forward(
        features, labels, w_blob, b_blob, dims)
    assert jnp.allclose(result, ref_result, atol=2e-2, rtol=2e-2), "result mismatch"
    assert jnp.allclose(loss, ref_loss, atol=2e-2, rtol=2e-2), "loss mismatch"
    assert int(correct) == int(ref_correct), "correct-count mismatch"

    print("KERNEL_OK")
</pallas_src>

<mosaic_0001>
module attributes {stable_mosaic.version = 11 : i64} {
  func.func @kernel(%arg0: memref<2x400xbf16, #tpu.memory_space<vmem>>, %arg1: memref<608x64xbf16, #tpu.memory_space<vmem>>, %arg2: memref<40x64xf32, #tpu.memory_space<vmem>>, %arg3: memref<2x1xi32, #tpu.memory_space<vmem>>, %arg4: memref<2x8xf32, #tpu.memory_space<vmem>>, %arg5: memref<1xf32, #tpu.memory_space<smem>>, %arg6: memref<1xi32, #tpu.memory_space<smem>>) attributes {dimension_semantics = [], scalar_prefetch = 0 : i64, scratch_operands = 0 : i64, tpu.core_type = #tpu.core_type<tc>} {
    %c0 = arith.constant 0 : index
    %c0_0 = arith.constant 0 : index
    %0 = vector.load %arg0[%c0, %c0_0] : memref<2x400xbf16, #tpu.memory_space<vmem>>, vector<2x400xbf16>
    %c0_1 = arith.constant 0 : index
    %c0_2 = arith.constant 0 : index
    %1 = vector.load %arg1[%c0_1, %c0_2] : memref<608x64xbf16, #tpu.memory_space<vmem>>, vector<400x64xbf16>
    %c0_3 = arith.constant 0 : index
    %c0_4 = arith.constant 0 : index
    %2 = vector.load %arg2[%c0_3, %c0_4] : memref<40x64xf32, #tpu.memory_space<vmem>>, vector<1x64xf32>
    %cst = arith.constant dense<0.000000e+00> : vector<2x64xf32>
    %3 = tpu.matmul %0, %1, %cst {dimension_numbers = #tpu.dot_dimension_numbers<[1], [0], [0], [1], [0, 0, 1, 1], [], []>} : vector<2x400xbf16>, vector<400x64xbf16>, vector<2x64xf32> -> vector<2x64xf32>
    %4 = vector.broadcast %2 : vector<1x64xf32> to vector<2x64xf32>
    %5 = arith.addf %3, %4 : vector<2x64xf32>
    %cst_5 = arith.constant 0.000000e+00 : f32
    %6 = vector.broadcast %cst_5 : f32 to vector<2x64xf32>
    %7 = arith.maximumf %5, %6 : vector<2x64xf32>
    %8 = arith.truncf %7 : vector<2x64xf32> to vector<2x64xbf16>
    %c400 = arith.constant 400 : index
    %c0_6 = arith.constant 0 : index
    %9 = vector.load %arg1[%c400, %c0_6] : memref<608x64xbf16, #tpu.memory_space<vmem>>, vector<64x64xbf16>
    %c8 = arith.constant 8 : index
    %c0_7 = arith.constant 0 : index
    %10 = vector.load %arg2[%c8, %c0_7] : memref<40x64xf32, #tpu.memory_space<vmem>>, vector<1x64xf32>
    %cst_8 = arith.constant dense<0.000000e+00> : vector<2x64xf32>
    %11 = tpu.matmul %8, %9, %cst_8 {dimension_numbers = #tpu.dot_dimension_numbers<[1], [0], [0], [1], [0, 0, 1, 1], [], []>} : vector<2x64xbf16>, vector<64x64xbf16>, vector<2x64xf32> -> vector<2x64xf32>
    %12 = vector.broadcast %10 : vector<1x64xf32> to vector<2x64xf32>
    %13 = arith.addf %11, %12 : vector<2x64xf32>
    %cst_9 = arith.constant 0.000000e+00 : f32
    %14 = vector.broadcast %cst_9 : f32 to vector<2x64xf32>
    %15 = arith.maximumf %13, %14 : vector<2x64xf32>
    %16 = arith.truncf %15 : vector<2x64xf32> to vector<2x64xbf16>
    %c464 = arith.constant 464 : index
    %c0_10 = arith.constant 0 : index
    %17 = vector.load %arg1[%c464, %c0_10] : memref<608x64xbf16, #tpu.memory_space<vmem>>, vector<64x64xbf16>
    %c16 = arith.constant 16 : index
    %c0_11 = arith.constant 0 : index
    %18 = vector.load %arg2[%c16, %c0_11] : memref<40x64xf32, #tpu.memory_space<vmem>>, vector<1x64xf32>
    %cst_12 = arith.constant dense<0.000000e+00> : vector<2x64xf32>
    %19 = tpu.matmul %16, %17, %cst_12 {dimension_numbers = #tpu.dot_dimension_numbers<[1], [0], [0], [1], [0, 0, 1, 1], [], []>} : vector<2x64xbf16>, vector<64x64xbf16>, vector<2x64xf32> -> vector<2x64xf32>
    %20 = vector.broadcast %18 : vector<1x64xf32> to vector<2x64xf32>
    %21 = arith.addf %19, %20 : vector<2x64xf32>
    %cst_13 = arith.constant 0.000000e+00 : f32
    %22 = vector.broadcast %cst_13 : f32 to vector<2x64xf32>
    %23 = arith.maximumf %21, %22 : vector<2x64xf32>
    %24 = arith.truncf %23 : vector<2x64xf32> to vector<2x64xbf16>
    %c528 = arith.constant 528 : index
    %c0_14 = arith.constant 0 : index
    %25 = vector.load %arg1[%c528, %c0_14] : memref<608x64xbf16, #tpu.memory_space<vmem>>, vector<64x16xbf16>
    %c24 = arith.constant 24 : index
    %c0_15 = arith.constant 0 : index
    %26 = vector.load %arg2[%c24, %c0_15] : memref<40x64xf32, #tpu.memory_space<vmem>>, vector<1x16xf32>
    %cst_16 = arith.constant dense<0.000000e+00> : vector<2x16xf32>
    %27 = tpu.matmul %24, %25, %cst_16 {dimension_numbers = #tpu.dot_dimension_numbers<[1], [0], [0], [1], [0, 0, 1, 1], [], []>} : vector<2x64xbf16>, vector<64x16xbf16>, vector<2x16xf32> -> vector<2x16xf32>
    %28 = vector.broadcast %26 : vector<1x16xf32> to vector<2x16xf32>
    %29 = arith.addf %27, %28 : vector<2x16xf32>
    %cst_17 = arith.constant 0.000000e+00 : f32
    %30 = vector.broadcast %cst_17 : f32 to vector<2x16xf32>
    %31 = arith.maximumf %29, %30 : vector<2x16xf32>
    %32 = arith.truncf %31 : vector<2x16xf32> to vector<2x16xbf16>
    %c592 = arith.constant 592 : index
    %c0_18 = arith.constant 0 : index
    %33 = vector.load %arg1[%c592, %c0_18] : memref<608x64xbf16, #tpu.memory_space<vmem>>, vector<16x8xbf16>
    %c32 = arith.constant 32 : index
    %c0_19 = arith.constant 0 : index
    %34 = vector.load %arg2[%c32, %c0_19] : memref<40x64xf32, #tpu.memory_space<vmem>>, vector<1x8xf32>
    %cst_20 = arith.constant dense<0.000000e+00> : vector<2x8xf32>
    %35 = tpu.matmul %32, %33, %cst_20 {dimension_numbers = #tpu.dot_dimension_numbers<[1], [0], [0], [1], [0, 0, 1, 1], [], []>} : vector<2x16xbf16>, vector<16x8xbf16>, vector<2x8xf32> -> vector<2x8xf32>
    %36 = vector.broadcast %34 : vector<1x8xf32> to vector<2x8xf32>
    %37 = arith.addf %35, %36 : vector<2x8xf32>
    %cst_21 = arith.constant dense<0xFF800000> : vector<2xf32>
    %38 = vector.multi_reduction <maximumf>, %37, %cst_21 [1] : vector<2x8xf32> to vector<2xf32>
    %39 = vector.shape_cast %38 : vector<2xf32> to vector<2x1xf32>
    %40 = vector.broadcast %39 : vector<2x1xf32> to vector<2x8xf32>
    %41 = arith.subf %37, %40 : vector<2x8xf32>
    %42 = math.exp %41 : vector<2x8xf32>
    %cst_22 = arith.constant dense<0.000000e+00> : vector<2xf32>
    %43 = vector.multi_reduction <add>, %42, %cst_22 [1] : vector<2x8xf32> to vector<2xf32>
    %44 = vector.shape_cast %43 : vector<2xf32> to vector<2x1xf32>
    %45 = math.log %44 : vector<2x1xf32>
    %46 = arith.addf %45, %39 : vector<2x1xf32>
    %47 = vector.broadcast %46 : vector<2x1xf32> to vector<2x8xf32>
    %48 = arith.subf %37, %47 : vector<2x8xf32>
    %c0_23 = arith.constant 0 : index
    %c0_24 = arith.constant 0 : index
    %49 = vector.load %arg4[%c0_23, %c0_24] : memref<2x8xf32, #tpu.memory_space<vmem>>, vector<2x8xf32>
    tpu.vector_store %arg4[%c0_23, %c0_24], %48 {strides = array<i32>} : memref<2x8xf32, #tpu.memory_space<vmem>>, vector<2x8xf32>,
    %c0_25 = arith.constant 0 : index
    %c0_26 = arith.constant 0 : index
    %50 = vector.load %arg3[%c0_25, %c0_26] : memref<2x1xi32, #tpu.memory_space<vmem>>, vector<2x1xi32>
    %51 = tpu.iota {dimensions = array<i32: 1>} : vector<2x8xi32>
    %52 = vector.broadcast %50 : vector<2x1xi32> to vector<2x8xi32>
    %53 = arith.cmpi eq, %51, %52 : vector<2x8xi32>
    %cst_27 = arith.constant 0.000000e+00 : f32
    %54 = vector.broadcast %cst_27 : f32 to vector<2x8xf32>
    %55 = arith.select %53, %48, %54 : vector<2x8xi1>, vector<2x8xf32>
    %56 = vector.shape_cast %55 : vector<2x8xf32> to vector<1x2x8xf32>
    %cst_28 = arith.constant dense<0.000000e+00> : vector<1xf32>
    %57 = vector.multi_reduction <add>, %56, %cst_28 [1, 2] : vector<1x2x8xf32> to vector<1xf32>
    %58 = vector.shape_cast %57 : vector<1xf32> to vector<1x1x1xf32>
    %59 = vector.extract %58[0, 0, 0] : f32 from vector<1x1x1xf32>
    %cst_29 = arith.constant 0.000000e+00 : f32
    %60 = arith.subf %cst_29, %59 : f32
    %cst_30 = arith.constant 5.000000e-01 : f32
    %61 = arith.mulf %60, %cst_30 : f32
    %c0_31 = arith.constant 0 : index
    %62 = memref.load %arg5[%c0_31] : memref<1xf32, #tpu.memory_space<smem>>
    memref.store %61, %arg5[%c0_31] : memref<1xf32, #tpu.memory_space<smem>>
    %63 = vector.broadcast %39 : vector<2x1xf32> to vector<2x8xf32>
    %64 = arith.cmpf oeq, %37, %63 : vector<2x8xf32>
    %65 = arith.sitofp %51 : vector<2x8xi32> to vector<2x8xf32>
    %cst_32 = arith.constant 8.000000e+00 : f32
    %66 = vector.broadcast %cst_32 : f32 to vector<2x8xf32>
    %67 = arith.select %64, %65, %66 : vector<2x8xi1>, vector<2x8xf32>
    %cst_33 = arith.constant dense<0x7F800000> : vector<2xf32>
    %68 = vector.multi_reduction <minimumf>, %67, %cst_33 [1] : vector<2x8xf32> to vector<2xf32>
    %69 = vector.shape_cast %68 : vector<2xf32> to vector<2x1xf32>
    %70 = arith.sitofp %50 : vector<2x1xi32> to vector<2x1xf32>
    %71 = arith.cmpf oeq, %69, %70 : vector<2x1xf32>
    %72 = arith.extui %71 : vector<2x1xi1> to vector<2x1xi32>
    %73 = vector.shape_cast %72 : vector<2x1xi32> to vector<1x2x1xi32>
    %cst_34 = arith.constant dense<0> : vector<1xi32>
    %74 = vector.multi_reduction <add>, %73, %cst_34 [1, 2] : vector<1x2x1xi32> to vector<1xi32>
    %75 = vector.shape_cast %74 : vector<1xi32> to vector<1x1x1xi32>
    %76 = vector.extract %75[0, 0, 0] : i32 from vector<1x1x1xi32>
    %c0_35 = arith.constant 0 : index
    %77 = memref.load %arg6[%c0_35] : memref<1xi32, #tpu.memory_space<smem>>
    memref.store %76, %arg6[%c0_35] : memref<1xi32, #tpu.memory_space<smem>>
    return
  }
}

</mosaic_0001>

<llo_original>
// kernel: example_dnn_forward.1
$region0: #{example_dnn_forward.1}
  #allocation0 [shape = 'u32[]', space=smem, size = 0x4, offset = 0x4, fixed_abs, tag = 'smem constant byte address 0x4 - core index']
  #allocation1 [shape = 'u32[144,128]{1,0:T(1,128)}', space=vmem, size = 0x12000, scoped, tag = 'internal scratch']
  %s0 = inlined_call_operand.vmem [shape: bf16[2,400], index: 0, kind: input, shape index: {}]
  %s1 = inlined_call_operand.vmem [shape: bf16[608,64], index: 1, kind: input, shape index: {}]
  %s2 = inlined_call_operand.vmem [shape: f32[40,64], index: 2, kind: input, shape index: {}]
  %s3 = inlined_call_operand.vmem [shape: s32[2,1], index: 3, kind: input, shape index: {}]
  %s4 = inlined_call_operand.hbm [shape: f32[2,8], index: 4, kind: output, shape index: {0}]
  %s5 = inlined_call_operand.hbm [shape: f32[1], index: 5, kind: output, shape index: {1}]
  %s6 = inlined_call_operand.hbm [shape: s32[1], index: 6, kind: output, shape index: {2}]
  %7 = xla_tuple %s4, %s5, %s6
  %s8 = sld [smem:[#allocation0]]
  $region42: #{example_dnn_forward.1} parent=0
    _
  %s10 = ssub.s32 1, %s8
  %s11 = scalar_select 0, %s10, %s8
  $region1: #{example_dnn_forward.1} parent=0
    #allocation2 [shape = 'u8[1024]{0}', space=vmem, size = 0x400, scoped, tag = 'output window, operand 0, single buffered']
    #allocation3 [shape = 's32[1]{0}', space=sflag, size = 0x4, scoped, tag = 'scoped memory for example_dnn_forward.1']
    #allocation4 [shape = 's32[1]{0}', space=sflag, size = 0x4, scoped, tag = 'scoped memory for example_dnn_forward.1']
    #allocation5 [shape = 'u8[512]{0}', space=smem, size = 0x200, scoped, tag = 'output window, operand 1, single buffered']
    #allocation6 [shape = 'u8[512]{0}', space=smem, size = 0x200, scoped, tag = 'output window, operand 2, single buffered']
    #allocation7 [shape = 's32[1]{0}', space=sflag, size = 0x4, scoped, tag = 'scoped memory for example_dnn_forward.1']
    %12 = vsyncpa [#allocation3], 0
    %13 = vsyncpa [#allocation4], 0
    %14 = vsyncpa [#allocation7], 0
    // Predicated region
    $region2: #{example_dnn_forward.1} parent=1 // pred_check
      _
    $region3: #{example_dnn_forward.1} parent=1 // pred_check_branch
      %16 = sbr.rel (0) target = $region5
    $region4: #{example_dnn_forward.1} parent=1 // pred_region
      _
    $region5: #{example_dnn_forward.1} parent=1 // pred_fallthru
      _
    // Predicated region
    $region6: #{example_dnn_forward.1} parent=1 // pred_check
      _
    $region7: #{example_dnn_forward.1} parent=1 // pred_check_branch
      %18 = sbr.rel (0) target = $region9
    $region8: #{example_dnn_forward.1} parent=1 // pred_region
      _
    $region9: #{example_dnn_forward.1} parent=1 // pred_fallthru
      _
    // Predicated region
    $region10: #{example_dnn_forward.1} parent=1 // pred_check
      _
    $region11: #{example_dnn_forward.1} parent=1 // pred_check_branch
      %20 = sbr.rel (0) target = $region13
    $region12: #{example_dnn_forward.1} parent=1 // pred_region
      _
    $region13: #{example_dnn_forward.1} parent=1 // pred_fallthru
      _
    // Predicated region
    $region14: #{example_dnn_forward.1} parent=1 // pred_check
      _
    $region15: #{example_dnn_forward.1} parent=1 // pred_check_branch
      %22 = sbr.rel (0) target = $region17
    $region16: #{example_dnn_forward.1} parent=1 // pred_region
      _
    $region17: #{example_dnn_forward.1} parent=1 // pred_fallthru
      _
    %v24 = vld [vmem:[%s0] sm:$0xf]
    %v25 = vld [vmem:[%s1] sm:$0xf]
    %v26 = vld [vmem:[%s1 + $0x4] sm:$0xf]
    %v27 = vld [vmem:[%s1 + $0x8] sm:$0xf]
    %v28 = vld [vmem:[%s1 + $0xc] sm:$0xf]
    %v29 = vld [vmem:[%s1 + $0x10] sm:$0xf]
    %v30 = vld [vmem:[%s1 + $0x14] sm:$0xf]
    %v31 = vld [vmem:[%s1 + $0x18] sm:$0xf]
    %v32 = vld [vmem:[%s1 + $0x1c] sm:$0xf]
    %v33 = vld [vmem:[%s1 + $0x20] sm:$0xf]
    %v34 = vld [vmem:[%s1 + $0x24] sm:$0xf]
    %v35 = vld [vmem:[%s1 + $0x28] sm:$0xf]
    %v36 = vld [vmem:[%s1 + $0x2c] sm:$0xf]
    %v37 = vld [vmem:[%s1 + $0x30] sm:$0xf]
    %v38 = vld [vmem:[%s1 + $0x34] sm:$0xf]
    %v39 = vld [vmem:[%s1 + $0x38] sm:$0xf]
    %v40 = vld [vmem:[%s1 + $0x3c] sm:$0xf]
    %v41 = vld [vmem:[%s1 + $0x40] sm:$0xf]
    %v42 = vld [vmem:[%s1 + $0x44] sm:$0xf]
    %v43 = vld [vmem:[%s1 + $0x48] sm:$0xf]
    %v44 = vld [vmem:[%s1 + $0x4c] sm:$0xf]
    %v45 = vld [vmem:[%s1 + $0x50] sm:$0xf]
    %v46 = vld [vmem:[%s1 + $0x54] sm:$0xf]
    %v47 = vld [vmem:[%s1 + $0x58] sm:$0xf]
    %v48 = vld [vmem:[%s1 + $0x5c] sm:$0xf]
    %v49 = vld [vmem:[%s1 + $0x60] sm:$0xf]
    %v50 = vld [vmem:[%s1 + $0x64] sm:$0xf]
    %v51 = vld [vmem:[%s1 + $0x68] sm:$0xf]
    %v52 = vld [vmem:[%s1 + $0x6c] sm:$0xf]
    %v53 = vld [vmem:[%s1 + $0x70] sm:$0xf]
    %v54 = vld [vmem:[%s1 + $0x74] sm:$0xf]
    %v55 = vld [vmem:[%s1 + $0x78] sm:$0xf]
    %v56 = vld [vmem:[%s1 + $0x7c] sm:$0xf]
    %v57 = vld [vmem:[%s1 + $0x80] sm:$0xf]
    %v58 = vld [vmem:[%s1 + $0x84] sm:$0xf]
    %v59 = vld [vmem:[%s1 + $0x88] sm:$0xf]
    %v60 = vld [vmem:[%s1 + $0x8c] sm:$0xf]
    %v61 = vld [vmem:[%s1 + $0x90] sm:$0xf]
    %v62 = vld [vmem:[%s1 + $0x94] sm:$0xf]
    %v63 = vld [vmem:[%s1 + $0x98] sm:$0xf]
    %v64 = vld [vmem:[%s1 + $0x9c] sm:$0xf]
    %v65 = vld [vmem:[%s1 + $0xa0] sm:$0xf]
    %v66 = vld [vmem:[%s1 + $0xa4] sm:$0xf]
    %v67 = vld [vmem:[%s1 + $0xa8] sm:$0xf]
    %v68 = vld [vmem:[%s1 + $0xac] sm:$0xf]
    %v69 = vld [vmem:[%s1 + $0xb0] sm:$0xf]
    %v70 = vld [vmem:[%s1 + $0xb4] sm:$0xf]
    %v71 = vld [vmem:[%s1 + $0xb8] sm:$0xf]
    %v72 = vld [vmem:[%s1 + $0xbc] sm:$0xf]
    %v73 = vld [vmem:[%s1 + $0xc0] sm:$0xf]
    %v74 = vld [vmem:[%s1 + $0xc4] sm:$0xf]
    %v75 = vld [vmem:[%s2] sm:$0x1]
    %v76 = vlaneseq
    %v77 = vshrl.u32 %v76, 7
    %v78 = vsub.s32 0, %v77
    %v79 = vrot.slane %v75, %v78
    %v82 = vunpack.c.l.s4 1966171168
    %v83 = vunpack.c.0.s8 %v82
    %v84 = vlaneseq
    %v85 = vshrl.u32 %v84, 7
    %v86 = vsub.s32 %v83, %v85
    %v87 = vrot.slane %v24, %v86
    %v88 = vcombine.high %v87, %v87
    %v90 = vunpack.c.l.s4 1966171168
    %v91 = vunpack.c.0.s8 %v90
    %v92 = vlaneseq
    %v93 = vshrl.u32 %v92, 7
    %v94 = vsub.s32 %v91, %v93
    %v95 = vrot.slane %v87, %v94
    %v97 = vunpack.c.l.s4 1966171168
    %v98 = vunpack.c.0.s8 %v97
    %v99 = vlaneseq
    %v100 = vshrl.u32 %v99, 7
    %v101 = vsub.s32 %v98, %v100
    %v102 = vrot.slane %v88, %v101
    %v103 = vcombine.high %v95, %v95
    %v104 = vcombine.high %v102, %v102
    %v158 = vunpack.c.l.b16 %v25
    %v159 = vunpack.c.l.b16 %v26
    %v160 = vunpack.c.l.b16 %v27
    %v161 = vunpack.c.l.b16 %v28
    %v162 = vunpack.c.l.b16 %v29
    %v163 = vunpack.c.l.b16 %v30
    %v164 = vunpack.c.l.b16 %v31
    %v165 = vunpack.c.l.b16 %v32
    %v166 = vunpack.c.l.b16 %v33
    %v167 = vunpack.c.l.b16 %v34
    %v168 = vunpack.c.l.b16 %v35
    %v169 = vunpack.c.l.b16 %v36
    %v170 = vunpack.c.l.b16 %v37
    %v171 = vunpack.c.l.b16 %v38
    %v172 = vunpack.c.l.b16 %v39
    %v173 = vunpack.c.l.b16 %v40
    %v174 = vunpack.c.l.b16 %v41
    %v175 = vunpack.c.l.b16 %v42
    %v176 = vunpack.c.l.b16 %v43
    %v177 = vunpack.c.l.b16 %v44
    %v178 = vunpack.c.l.b16 %v45
    %v179 = vunpack.c.l.b16 %v46
    %v180 = vunpack.c.l.b16 %v47
    %v181 = vunpack.c.l.b16 %v48
    %v182 = vunpack.c.l.b16 %v49
    %v183 = vunpack.c.l.b16 %v50
    %v184 = vunpack.c.l.b16 %v51
    %v185 = vunpack.c.l.b16 %v52
    %v186 = vunpack.c.l.b16 %v53
    %v187 = vunpack.c.l.b16 %v54
    %v188 = vunpack.c.l.b16 %v55
    %v189 = vunpack.c.l.b16 %v56
    %v190 = vunpack.c.l.b16 %v57
    %v191 = vunpack.c.l.b16 %v58
    %v192 = vunpack.c.l.b16 %v59
    %v193 = vunpack.c.l.b16 %v60
    %v194 = vunpack.c.l.b16 %v61
    %v195 = vunpack.c.l.b16 %v62
    %v196 = vunpack.c.l.b16 %v63
    %v197 = vunpack.c.l.b16 %v64
    %v198 = vunpack.c.l.b16 %v65
    %v199 = vunpack.c.l.b16 %v66
    %v200 = vunpack.c.l.b16 %v67
    %v201 = vunpack.c.l.b16 %v68
    %v202 = vunpack.c.l.b16 %v69
    %v203 = vunpack.c.l.b16 %v70
    %v204 = vunpack.c.l.b16 %v71
    %v205 = vunpack.c.l.b16 %v72
    %v206 = vunpack.c.l.b16 %v73
    %v207 = vunpack.c.l.b16 %v74
    %v208 = vpack.c.b16 %v159, %v158
    %v209 = vpack.c.b16 %v161, %v160
    %v210 = vpack.c.b16 %v163, %v162
    %v211 = vpack.c.b16 %v165, %v164
    %v212 = vpack.c.b16 %v167, %v166
    %v213 = vpack.c.b16 %v169, %v168
    %v214 = vpack.c.b16 %v171, %v170
    %v215 = vpack.c.b16 %v173, %v172
    %v216 = vpack.c.b16 %v175, %v174
    %v217 = vpack.c.b16 %v177, %v176
    %v218 = vpack.c.b16 %v179, %v178
    %v219 = vpack.c.b16 %v181, %v180
    %v220 = vpack.c.b16 %v183, %v182
    %v221 = vpack.c.b16 %v185, %v184
    %v222 = vpack.c.b16 %v187, %v186
    %v223 = vpack.c.b16 %v189, %v188
    %v224 = vpack.c.b16 %v191, %v190
    %v225 = vpack.c.b16 %v193, %v192
    %v226 = vpack.c.b16 %v195, %v194
    %v227 = vpack.c.b16 %v197, %v196
    %v228 = vpack.c.b16 %v199, %v198
    %v229 = vpack.c.b16 %v201, %v200
    %v230 = vpack.c.b16 %v203, %v202
    %v231 = vpack.c.b16 %v205, %v204
    %v232 = vpack.c.b16 %v207, %v206
    %vm258 = vcmask 130048
    %v260 = vsel %vm258, %v104, 0
    %262 = vmatprep.subr.bf16.mxu0 0
    %263 = vmatpush1.bf16.msra.mxu0 %v208
    %264 = vmatprep.subr.bf16.mxu0 0
    %265 = vmatpush1.bf16.msra.mxu0 %v209
    %266 = vmatprep.subr.bf16.mxu0 0
    %267 = vmatpush1.bf16.msra.mxu0 %v210
    %268 = vmatprep.subr.bf16.mxu0 0
    %269 = vmatpush1.bf16.msra.mxu0 %v211
    %270 = vmatprep.subr.bf16.mxu0 0
    %271 = vmatpush1.bf16.msra.mxu0 %v212
    %272 = vmatprep.subr.bf16.mxu0 0
    %273 = vmatpush1.bf16.msra.mxu0 %v213
    %274 = vmatprep.subr.bf16.mxu0 0
    %275 = vmatpush1.bf16.msra.mxu0 %v214
    %276 = vmatprep.subr.bf16.mxu0 0
    %277 = vmatpush1.bf16.msra.mxu0 %v215
    %278 = vmatprep.subr.bf16.mxu0 0
    %279 = vmatpush1.bf16.msra.mxu0 %v216
    %280 = vmatprep.subr.bf16.mxu0 0
    %281 = vmatpush1.bf16.msra.mxu0 %v217
    %282 = vmatprep.subr.bf16.mxu0 0
    %283 = vmatpush1.bf16.msra.mxu0 %v218
    %284 = vmatprep.subr.bf16.mxu0 0
    %285 = vmatpush1.bf16.msra.mxu0 %v219
    %286 = vmatprep.subr.bf16.mxu0 0
    %287 = vmatpush1.bf16.msra.mxu0 %v220
    %288 = vmatprep.subr.bf16.mxu0 0
    %289 = vmatpush1.bf16.msra.mxu0 %v221
    %290 = vmatprep.subr.bf16.mxu0 0
    %291 = vmatpush1.bf16.msra.mxu0 %v222
    %292 = vmatprep.subr.bf16.mxu0 0
    %293 = vmatpush1.bf16.msra.mxu0 %v223
    %294 = vmatprep.mubr.bf16.mxu0 %v102
    %295 = vmatmul.mubr.bf16.gmra.mrb[0].mxu0 %v95
    %v296 = vpop.f32.mrb[0].mxu0
    %v297 = vadd.f32 %v79, %v296
    %v298 = vpop.f32.mrb[0].mxu0
    %v299 = vpop.f32.mrb[0].mxu0
    %v300 = vpop.f32.mrb[0].mxu0
    %301 = vdwg.mxu0
    %302 = vmatprep.subr.bf16.mxu0 0
    %303 = vmatpush1.bf16.msra.mxu0 %v224
    %304 = vmatprep.subr.bf16.mxu0 0
    %305 = vmatpush1.bf16.msra.mxu0 %v225
    %306 = vmatprep.subr.bf16.mxu0 0
    %307 = vmatpush1.bf16.msra.mxu0 %v226
    %308 = vmatprep.subr.bf16.mxu0 0
    %309 = vmatpush1.bf16.msra.mxu0 %v227
    %310 = vmatprep.subr.bf16.mxu0 0
    %311 = vmatpush1.bf16.msra.mxu0 %v228
    %312 = vmatprep.subr.bf16.mxu0 0
    %313 = vmatpush1.bf16.msra.mxu0 %v229
    %314 = vmatprep.subr.bf16.mxu0 0
    %315 = vmatpush1.bf16.msra.mxu0 %v230
    %316 = vmatprep.subr.bf16.mxu0 0
    %317 = vmatpush1.bf16.msra.mxu0 %v231
    %318 = vmatprep.subr.bf16.mxu0 0
    %319 = vmatpush1.bf16.msra.mxu0 %v232
    %320 = vmatprep.subr.bf16.mxu0 0
    %321 = vmatpush1.bf16.msra.mxu0 0
    %322 = vmatprep.subr.bf16.mxu0 0
    %323 = vmatpush1.bf16.msra.mxu0 0
    %324 = vmatprep.subr.bf16.mxu0 0
    %325 = vmatpush1.bf16.msra.mxu0 0
    %326 = vmatprep.subr.bf16.mxu0 0
    %327 = vmatpush1.bf16.msra.mxu0 0
    %328 = vmatprep.subr.bf16.mxu0 0
    %329 = vmatpush1.bf16.msra.mxu0 0
    %330 = vmatprep.subr.bf16.mxu0 0
    %331 = vmatpush1.bf16.msra.mxu0 0
    %332 = vmatprep.subr.bf16.mxu0 0
    %333 = vmatpush1.bf16.msra.mxu0 0
    %334 = vmatprep.mubr.bf16.mxu0 %v260
    %335 = vmatmul.mubr.bf16.gmra.mrb[0].mxu0 %v103
    %v336 = vpop.f32.mrb[0].mxu0
    %v337 = vadd.f32 %v297, %v336
    %v338 = vpop.f32.mrb[0].mxu0
    %v339 = vpop.f32.mrb[0].mxu0
    %v340 = vpop.f32.mrb[0].mxu0
    %341 = vdwg.mxu0
    %v342 = vmax.f32 %v337, 0.0
    %v343 = vpack.c.bf16 %v342, %v342
    %v344 = vld [vmem:[%s1 + $0xc8] sm:$0xf]
    %v345 = vld [vmem:[%s1 + $0xcc] sm:$0xf]
    %v346 = vld [vmem:[%s1 + $0xd0] sm:$0xf]
    %v347 = vld [vmem:[%s1 + $0xd4] sm:$0xf]
    %v348 = vld [vmem:[%s1 + $0xd8] sm:$0xf]
    %v349 = vld [vmem:[%s1 + $0xdc] sm:$0xf]
    %v350 = vld [vmem:[%s1 + $0xe0] sm:$0xf]
    %v351 = vld [vmem:[%s1 + $0xe4] sm:$0xf]
    %v352 = vld [vmem:[%s2 + $0x8] sm:$0x1]
    %v353 = vlaneseq
    %v354 = vshrl.u32 %v353, 7
    %v355 = vsub.s32 0, %v354
    %v356 = vrot.slane %v352, %v355
    %v365 = vunpack.c.l.b16 %v344
    %v366 = vunpack.c.l.b16 %v345
    %v367 = vunpack.c.l.b16 %v346
    %v368 = vunpack.c.l.b16 %v347
    %v369 = vunpack.c.l.b16 %v348
    %v370 = vunpack.c.l.b16 %v349
    %v371 = vunpack.c.l.b16 %v350
    %v372 = vunpack.c.l.b16 %v351
    %v373 = vpack.c.b16 %v366, %v365
    %v374 = vpack.c.b16 %v368, %v367
    %v375 = vpack.c.b16 %v370, %v369
    %v376 = vpack.c.b16 %v372, %v371
    %vm381 = vcmask 523264
    %v383 = vsel %vm381, %v343, 0
    %385 = vmatprep.subr.bf16.mxu0 0
    %386 = vmatpush1.bf16.msra.mxu0 %v373
    %387 = vmatprep.subr.bf16.mxu0 0
    %388 = vmatpush1.bf16.msra.mxu0 %v374
    %389 = vmatprep.subr.bf16.mxu0 0
    %390 = vmatpush1.bf16.msra.mxu0 %v375
    %391 = vmatprep.subr.bf16.mxu0 0
    %392 = vmatpush1.bf16.msra.mxu0 %v376
    %393 = vmatprep.subr.bf16.mxu0 0
    %394 = vmatpush1.bf16.msra.mxu0 0
    %395 = vmatprep.subr.bf16.mxu0 0
    %396 = vmatpush1.bf16.msra.mxu0 0
    %397 = vmatprep.subr.bf16.mxu0 0
    %398 = vmatpush1.bf16.msra.mxu0 0
    %399 = vmatprep.subr.bf16.mxu0 0
    %400 = vmatpush1.bf16.msra.mxu0 0
    %401 = vmatprep.subr.bf16.mxu0 0
    %402 = vmatpush1.bf16.msra.mxu0 0
    %403 = vmatprep.subr.bf16.mxu0 0
    %404 = vmatpush1.bf16.msra.mxu0 0
    %405 = vmatprep.subr.bf16.mxu0 0
    %406 = vmatpush1.bf16.msra.mxu0 0
    %407 = vmatprep.subr.bf16.mxu0 0
    %408 = vmatpush1.bf16.msra.mxu0 0
    %409 = vmatprep.subr.bf16.mxu0 0
    %410 = vmatpush1.bf16.msra.mxu0 0
    %411 = vmatprep.subr.bf16.mxu0 0
    %412 = vmatpush1.bf16.msra.mxu0 0
    %413 = vmatprep.subr.bf16.mxu0 0
    %414 = vmatpush1.bf16.msra.mxu0 0
    %415 = vmatprep.subr.bf16.mxu0 0
    %416 = vmatpush1.bf16.msra.mxu0 0
    %417 = vmatprep.mubr.bf16.mxu0 0
    %418 = vmatmul.mubr.bf16.gmra.mrb[0].mxu0 %v383
    %v419 = vpop.f32.mrb[0].mxu0
    %v420 = vadd.f32 %v356, %v419
    %v421 = vpop.f32.mrb[0].mxu0
    %v422 = vpop.f32.mrb[0].mxu0
    %v423 = vpop.f32.mrb[0].mxu0
    %424 = vdwg.mxu0
    %v425 = vmax.f32 %v420, 0.0
    %v426 = vpack.c.bf16 %v425, %v425
    %v427 = vld [vmem:[%s1 + $0xe8] sm:$0xf]
    %v428 = vld [vmem:[%s1 + $0xec] sm:$0xf]
    %v429 = vld [vmem:[%s1 + $0xf0] sm:$0xf]
    %v430 = vld [vmem:[%s1 + $0xf4] sm:$0xf]
    %v431 = vld [vmem:[%s1 + $0xf8] sm:$0xf]
    %v432 = vld [vmem:[%s1 + $0xfc] sm:$0xf]
    %v433 = vld [vmem:[%s1 + $0x100] sm:$0xf]
    %v434 = vld [vmem:[%s1 + $0x104] sm:$0xf]
    %v435 = vld [vmem:[%s2 + $0x10] sm:$0x1]
    %v436 = vlaneseq
    %v437 = vshrl.u32 %v436, 7
    %v438 = vsub.s32 0, %v437
    %v439 = vrot.slane %v435, %v438
    %v448 = vunpack.c.l.b16 %v427
    %v449 = vunpack.c.l.b16 %v428
    %v450 = vunpack.c.l.b16 %v429
    %v451 = vunpack.c.l.b16 %v430
    %v452 = vunpack.c.l.b16 %v431
    %v453 = vunpack.c.l.b16 %v432
    %v454 = vunpack.c.l.b16 %v433
    %v455 = vunpack.c.l.b16 %v434
    %v456 = vpack.c.b16 %v449, %v448
    %v457 = vpack.c.b16 %v451, %v450
    %v458 = vpack.c.b16 %v453, %v452
    %v459 = vpack.c.b16 %v455, %v454
    %v465 = vsel %vm381, %v426, 0
    %467 = vmatprep.subr.bf16.mxu0 0
    %468 = vmatpush1.bf16.msra.mxu0 %v456
    %469 = vmatprep.subr.bf16.mxu0 0
    %470 = vmatpush1.bf16.msra.mxu0 %v457
    %471 = vmatprep.subr.bf16.mxu0 0
    %472 = vmatpush1.bf16.msra.mxu0 %v458
    %473 = vmatprep.subr.bf16.mxu0 0
    %474 = vmatpush1.bf16.msra.mxu0 %v459
    %475 = vmatprep.subr.bf16.mxu0 0
    %476 = vmatpush1.bf16.msra.mxu0 0
    %477 = vmatprep.subr.bf16.mxu0 0
    %478 = vmatpush1.bf16.msra.mxu0 0
    %479 = vmatprep.subr.bf16.mxu0 0
    %480 = vmatpush1.bf16.msra.mxu0 0
    %481 = vmatprep.subr.bf16.mxu0 0
    %482 = vmatpush1.bf16.msra.mxu0 0
    %483 = vmatprep.subr.bf16.mxu0 0
    %484 = vmatpush1.bf16.msra.mxu0 0
    %485 = vmatprep.subr.bf16.mxu0 0
    %486 = vmatpush1.bf16.msra.mxu0 0
    %487 = vmatprep.subr.bf16.mxu0 0
    %488 = vmatpush1.bf16.msra.mxu0 0
    %489 = vmatprep.subr.bf16.mxu0 0
    %490 = vmatpush1.bf16.msra.mxu0 0
    %491 = vmatprep.subr.bf16.mxu0 0
    %492 = vmatpush1.bf16.msra.mxu0 0
    %493 = vmatprep.subr.bf16.mxu0 0
    %494 = vmatpush1.bf16.msra.mxu0 0
    %495 = vmatprep.subr.bf16.mxu0 0
    %496 = vmatpush1.bf16.msra.mxu0 0
    %497 = vmatprep.subr.bf16.mxu0 0
    %498 = vmatpush1.bf16.msra.mxu0 0
    %499 = vmatprep.mubr.bf16.mxu0 0
    %500 = vmatmul.mubr.bf16.gmra.mrb[0].mxu0 %v465
    %v501 = vpop.f32.mrb[0].mxu0
    %v502 = vadd.f32 %v439, %v501
    %v503 = vpop.f32.mrb[0].mxu0
    %v504 = vpop.f32.mrb[0].mxu0
    %v505 = vpop.f32.mrb[0].mxu0
    %506 = vdwg.mxu0
    %v507 = vmax.f32 %v502, 0.0
    %v508 = vpack.c.bf16 %v507, %v507
    %v509 = vld [vmem:[%s1 + $0x108] sm:$0xf]
    %v510 = vld [vmem:[%s1 + $0x10c] sm:$0xf]
    %v511 = vld [vmem:[%s1 + $0x110] sm:$0xf]
    %v512 = vld [vmem:[%s1 + $0x114] sm:$0xf]
    %v513 = vld [vmem:[%s1 + $0x118] sm:$0xf]
    %v514 = vld [vmem:[%s1 + $0x11c] sm:$0xf]
    %v515 = vld [vmem:[%s1 + $0x120] sm:$0xf]
    %v516 = vld [vmem:[%s1 + $0x124] sm:$0xf]
    %v517 = vld [vmem:[%s2 + $0x18] sm:$0x1]
    %v518 = vlaneseq
    %v519 = vshrl.u32 %v518, 7
    %v520 = vsub.s32 0, %v519
    %v521 = vrot.slane %v517, %v520
    %v530 = vunpack.c.l.b16 %v509
    %v531 = vunpack.c.l.b16 %v510
    %v532 = vunpack.c.l.b16 %v511
    %v533 = vunpack.c.l.b16 %v512
    %v534 = vunpack.c.l.b16 %v513
    %v535 = vunpack.c.l.b16 %v514
    %v536 = vunpack.c.l.b16 %v515
    %v537 = vunpack.c.l.b16 %v516
    %v538 = vpack.c.b16 %v531, %v530
    %v539 = vpack.c.b16 %v533, %v532
    %v540 = vpack.c.b16 %v535, %v534
    %v541 = vpack.c.b16 %v537, %v536
    %v547 = vsel %vm381, %v508, 0
    %549 = vmatprep.subr.bf16.mxu0 0
    %550 = vmatpush1.bf16.msra.mxu0 %v538
    %551 = vmatprep.subr.bf16.mxu0 0
    %552 = vmatpush1.bf16.msra.mxu0 %v539
    %553 = vmatprep.subr.bf16.mxu0 0
    %554 = vmatpush1.bf16.msra.mxu0 %v540
    %555 = vmatprep.subr.bf16.mxu0 0
    %556 = vmatpush1.bf16.msra.mxu0 %v541
    %557 = vmatprep.subr.bf16.mxu0 0
    %558 = vmatpush1.bf16.msra.mxu0 0
    %559 = vmatprep.subr.bf16.mxu0 0
    %560 = vmatpush1.bf16.msra.mxu0 0
    %561 = vmatprep.subr.bf16.mxu0 0
    %562 = vmatpush1.bf16.msra.mxu0 0
    %563 = vmatprep.subr.bf16.mxu0 0
    %564 = vmatpush1.bf16.msra.mxu0 0
    %565 = vmatprep.subr.bf16.mxu0 0
    %566 = vmatpush1.bf16.msra.mxu0 0
    %567 = vmatprep.subr.bf16.mxu0 0
    %568 = vmatpush1.bf16.msra.mxu0 0
    %569 = vmatprep.subr.bf16.mxu0 0
    %570 = vmatpush1.bf16.msra.mxu0 0
    %571 = vmatprep.subr.bf16.mxu0 0
    %572 = vmatpush1.bf16.msra.mxu0 0
    %573 = vmatprep.subr.bf16.mxu0 0
    %574 = vmatpush1.bf16.msra.mxu0 0
    %575 = vmatprep.subr.bf16.mxu0 0
    %576 = vmatpush1.bf16.msra.mxu0 0
    %577 = vmatprep.subr.bf16.mxu0 0
    %578 = vmatpush1.bf16.msra.mxu0 0
    %579 = vmatprep.subr.bf16.mxu0 0
    %580 = vmatpush1.bf16.msra.mxu0 0
    %581 = vmatprep.mubr.bf16.mxu0 0
    %582 = vmatmul.mubr.bf16.gmra.mrb[0].mxu0 %v547
    %v583 = vpop.f32.mrb[0].mxu0
    %v584 = vadd.f32 %v521, %v583
    %v585 = vpop.f32.mrb[0].mxu0
    %v586 = vpop.f32.mrb[0].mxu0
    %v587 = vpop.f32.mrb[0].mxu0
    %588 = vdwg.mxu0
    %v589 = vmax.f32 %v584, 0.0
    %v590 = vpack.c.bf16 %v589, %v589
    %v591 = vld [vmem:[%s1 + $0x128] sm:$0xf]
    %v592 = vld [vmem:[%s1 + $0x12c] sm:$0xf]
    %v593 = vld [vmem:[%s2 + $0x20] sm:$0x1]
    %v594 = vlaneseq
    %v595 = vshrl.u32 %v594, 7
    %v596 = vsub.s32 0, %v595
    %v597 = vrot.slane %v593, %v596
    %v600 = vunpack.c.l.b16 %v591
    %v601 = vunpack.c.l.b16 %v592
    %v602 = vpack.c.b16 %v601, %v600
    %v605 = vsel %vm258, %v590, 0
    %607 = vmatprep.subr.bf16.mxu0 0
    %608 = vmatpush1.bf16.msra.mxu0 %v602
    %609 = vmatprep.subr.bf16.mxu0 0
    %610 = vmatpush1.bf16.msra.mxu0 0
    %611 = vmatprep.subr.bf16.mxu0 0
    %612 = vmatpush1.bf16.msra.mxu0 0
    %613 = vmatprep.subr.bf16.mxu0 0
    %614 = vmatpush1.bf16.msra.mxu0 0
    %615 = vmatprep.subr.bf16.mxu0 0
    %616 = vmatpush1.bf16.msra.mxu0 0
    %617 = vmatprep.subr.bf16.mxu0 0
    %618 = vmatpush1.bf16.msra.mxu0 0
    %619 = vmatprep.subr.bf16.mxu0 0
    %620 = vmatpush1.bf16.msra.mxu0 0
    %621 = vmatprep.subr.bf16.mxu0 0
    %622 = vmatpush1.bf16.msra.mxu0 0
    %623 = vmatprep.subr.bf16.mxu0 0
    %624 = vmatpush1.bf16.msra.mxu0 0
    %625 = vmatprep.subr.bf16.mxu0 0
    %626 = vmatpush1.bf16.msra.mxu0 0
    %627 = vmatprep.subr.bf16.mxu0 0
    %628 = vmatpush1.bf16.msra.mxu0 0
    %629 = vmatprep.subr.bf16.mxu0 0
    %630 = vmatpush1.bf16.msra.mxu0 0
    %631 = vmatprep.subr.bf16.mxu0 0
    %632 = vmatpush1.bf16.msra.mxu0 0
    %633 = vmatprep.subr.bf16.mxu0 0
    %634 = vmatpush1.bf16.msra.mxu0 0
    %635 = vmatprep.subr.bf16.mxu0 0
    %636 = vmatpush1.bf16.msra.mxu0 0
    %637 = vmatprep.subr.bf16.mxu0 0
    %638 = vmatpush1.bf16.msra.mxu0 0
    %639 = vmatprep.mubr.bf16.mxu0 0
    %640 = vmatmul.mubr.bf16.gmra.mrb[0].mxu0 %v605
    %v641 = vpop.f32.mrb[0].mxu0
    %v642 = vadd.f32 %v597, %v641
    %v643 = vpop.f32.mrb[0].mxu0
    %v644 = vpop.f32.mrb[0].mxu0
    %v645 = vpop.f32.mrb[0].mxu0
    %646 = vdwg.mxu0
    %vm647 = vcmask 58368
    %v648 = vsel %vm647, %v642, -inf
    %649 = vmax.xlane.f32.xlu0 %v648
    %v650 = vpop.xlane.xlu0 %649
    %v651 = vsub.f32 %v642, %v650
    %v652 = vmul.f32 %v651, 1.442695
    %v653 = vpow.pop %v652
    %v654 = vsel %vm647, %v653, 0.0
    %655 = vadd.xlane.f32.xlu0 %v654
    %v656 = vpop.xlane.xlu0 %655
    %v657 = vlog2.pop %v656
    %v658 = vmul.f32 %v657, 0.6931472
    %v659 = vadd.f32 %v658, %v650
    %v660 = vsub.f32 %v642, %v659
    %661 = vst.msk [vmem:[#allocation2] sm:$0x3] %vm647, %v660
    %v662 = vld [vmem:[%s3] sm:$0x3]
    %v663 = vlaneseq
    %v664 = vand.u32 %v663, 127
    %665 = vset.pattern.permute.xlu0 0
    %666 = vperm.xlu0 %665, %v662
    %v667 = vpop.permute.xlu0 %666
    %vm668 = vcmp.eq.s32.totalorder %v664, %v667
    %v669 = vsel %vm668, %v660, 0.0
    %v670 = vsel %vm647, %v669, 0.0
    %671 = vadd.xlane.f32.xlu0 %v670
    %v672 = vpop.xlane.xlu0 %671
    %v673 = vrot.slane %v672, 4
    %v674 = vadd.f32 %v672, %v673
    %v675 = vrot.slane %v674, 2
    %v676 = vadd.f32 %v674, %v675
    %v677 = vrot.slane %v676, 1
    %v678 = vadd.f32 %v676, %v677
    %s679 = vtos %v678
    %s680 = ssub.f32 0.0, %s679
    %s681 = smul.f32 %s680, 0.5
    %s682 = scalar_lea.smem [#allocation5], 0
    %683 = sst [smem:[%s682]] %s681
    %vm684 = vcmp.eq.f32.partialorder %v642, %v650
    %v685 = vcvt.s32.f32 %v664
    %v686 = vsel %vm684, %v685, 8.0
    %v687 = vsel %vm647, %v686, inf
    %688 = vmin.xlane.f32.xlu0 %v687
    %v689 = vpop.xlane.xlu0 %688
    %v690 = vcvt.s32.f32 %v662
    %vm691 = vcmp.eq.f32.partialorder %v689, %v690
    %v692 = vsel %vm691, 1, 0
    %vm693 = vcmask 1024
    %v694 = vsel %vm693, %v692, 0
    %v695 = vand.u32 %v694, 65535
    %v696 = vshrl.u32 %v694, 16
    %v697 = vcvt.s32.f32 %v695
    %v698 = vcvt.s32.f32 %v696
    %699 = vadd.xlane.f32.xlu0 %v697
    %v700 = vpop.xlane.xlu0 %699
    %701 = vadd.xlane.f32.xlu0 %v698
    %v702 = vpop.xlane.xlu0 %701
    %v703 = vcvt.f32.s32 %v700
    %v704 = vcvt.f32.s32 %v702
    %v705 = vshll.u32 %v704, 16
    %v706 = vadd.s32 %v705, %v703
    %v707 = vrot.slane %v706, 4
    %v708 = vadd.s32 %v706, %v707
    %v709 = vrot.slane %v708, 2
    %v710 = vadd.s32 %v708, %v709
    %v711 = vrot.slane %v710, 1
    %v712 = vadd.s32 %v710, %v711
    %s713 = vtos %v712
    %s714 = scalar_lea.smem [#allocation6], 0
    %715 = sst [smem:[%s714]] %s713
    // Predicated region
    $region18: #{example_dnn_forward.1} parent=1 // pred_check
      _
    $region19: #{example_dnn_forward.1} parent=1 // pred_check_branch
      %717 = sbr.rel (0) target = $region21
    $region20: #{example_dnn_forward.1} parent=1 // pred_region
      %s719 = ssub.s32 32, 32
      %720 = vsyncadd [#allocation3], %s719
      %s722 = sshll.u32 [#allocation2], 4
      %s723 = int_to_ptr.vmem [resolvable:$true] %s722
      %725 = dma.vmem_to_hbm [thread:$0]  %s723, 32, %s4, [#allocation3]
    $region21: #{example_dnn_forward.1} parent=1 // pred_fallthru
      _
    // Predicated region
    $region22: #{example_dnn_forward.1} parent=1 // pred_check
      _
    $region23: #{example_dnn_forward.1} parent=1 // pred_check_branch
      %727 = sbr.rel (0) target = $region25
    $region24: #{example_dnn_forward.1} parent=1 // pred_region
      %s729 = ssub.s32 16, 16
      %730 = vsyncadd [#allocation4], %s729
      %733 = dma.smem_to_hbm [#allocation5], 16, %s5, [#allocation4]
    $region25: #{example_dnn_forward.1} parent=1 // pred_fallthru
      _
    // Predicated region
    $region26: #{example_dnn_forward.1} parent=1 // pred_check
      _
    $region27: #{example_dnn_forward.1} parent=1 // pred_check_branch
      %735 = sbr.rel (0) target = $region29
    $region28: #{example_dnn_forward.1} parent=1 // pred_region
      %s737 = ssub.s32 16, 16
      %738 = vsyncadd [#allocation7], %s737
      %741 = dma.smem_to_hbm [#allocation6], 16, %s6, [#allocation7]
    $region29: #{example_dnn_forward.1} parent=1 // pred_fallthru
      _
    // Predicated region
    $region30: #{example_dnn_forward.1} parent=1 // pred_check
      _
    $region31: #{example_dnn_forward.1} parent=1 // pred_check_branch
      %743 = sbr.rel (0) target = $region33
    $region32: #{example_dnn_forward.1} parent=1 // pred_region
      %744 = dma.done [#allocation3], 32
    $region33: #{example_dnn_forward.1} parent=1 // pred_fallthru
      _
    // Predicated region
    $region34: #{example_dnn_forward.1} parent=1 // pred_check
      _
    $region35: #{example_dnn_forward.1} parent=1 // pred_check_branch
      %746 = sbr.rel (0) target = $region37
    $region36: #{example_dnn_forward.1} parent=1 // pred_region
      %747 = dma.done [#allocation4], 16
    $region37: #{example_dnn_forward.1} parent=1 // pred_fallthru
      _
    // Predicated region
    $region38: #{example_dnn_forward.1} parent=1 // pred_check
      _
    $region39: #{example_dnn_forward.1} parent=1 // pred_check_branch
      %749 = sbr.rel (0) target = $region41
    $region40: #{example_dnn_forward.1} parent=1 // pred_region
      %750 = dma.done [#allocation7], 16
    $region41: #{example_dnn_forward.1} parent=1 // pred_fallthru
      _
    %751 = sfence
    %752 = vsyncpa [#allocation3], 1
    %753 = vsyncpa [#allocation4], 1
    %754 = vsyncpa [#allocation7], 1

</llo_original>
